<compile_context>
chip_gen: v5e
topology: v5e:2x2
jax: 0.10.0
libtpu: 0.0.40
codegen_flags: <defaults>
</compile_context>

<pallas_src>
import jax
import jax.numpy as jnp
from jax.experimental import pallas as pl
from jax.experimental.pallas import tpu as pltpu

INPUT_SIZE = 9
HIDDEN_SIZE = 64
OUTPUT_SIZE = 1
BN_EPS = 1e-5

# Padded (TPU tile friendly) sizes: features/hidden/output -> 128 lanes.
F_PAD = 128
H_PAD = 128
O_PAD = 128

FUSED_MAX_B = 512      # below this, single whole-VMEM call (no grid)
DEFAULT_B_TILE = 256   # rows per grid step when batch-tiled


def _round_up(n, m):
    return ((n + m - 1) // m) * m


def _mlp_kernel(x_ref, w1_ref, c1_ref, w2_ref, c2_ref, w3_ref, b3_ref, o_ref):
    """Fused fc1(+bn1 folded) -> relu -> fc2(+bn2 folded) -> relu -> fc3."""
    cdt = w1_ref.dtype  # MXU operand dtype (bf16); accumulate + epilogue in f32
    h = jnp.dot(x_ref[...], w1_ref[...], preferred_element_type=jnp.float32)
    h = jnp.maximum(h + c1_ref[...], 0.0)
    h = jnp.dot(h.astype(cdt), w2_ref[...], preferred_element_type=jnp.float32)
    h = jnp.maximum(h + c2_ref[...], 0.0)
    o = jnp.dot(h.astype(cdt), w3_ref[...], preferred_element_type=jnp.float32)
    o_ref[...] = o + b3_ref[...]


# ----------------------------------------------------------------------------
# Parameter preparation (done once, outside the per-call path).
# ----------------------------------------------------------------------------
def _pad2d(a, rows, cols):
    out = jnp.zeros((rows, cols), jnp.float32)
    return out.at[: a.shape[0], : a.shape[1]].set(a.astype(jnp.float32))


def _fold_bn(gamma, beta, mean, var):
    scale = gamma / jnp.sqrt(var + BN_EPS)
    shift = beta - mean * scale
    return scale, shift


def prepare_params(params, compute_dtype=jnp.bfloat16):
    """Fold BN into weights, pad to TPU tiles, cast MXU operands to bf16.

    Returns two packed variants: "bn" (batch > 1, BN active) and "no_bn"
    (batch == 1, BN skipped, matching the PyTorch `x.shape[0] > 1` guard).
    """
    w1, b1 = params["w1"], params["b1"]
    w2, b2 = params["w2"], params["b2"]
    w3, b3 = params["w3"], params["b3"]
    s1, t1 = _fold_bn(*params["bn1"])
    s2, t2 = _fold_bn(*params["bn2"])

    def pack(w1_, c1_, w2_, c2_):
        return dict(
            w1=_pad2d(w1_, F_PAD, H_PAD).astype(compute_dtype),
            c1=_pad2d(c1_[None, :], 1, H_PAD),                      # f32
            w2=_pad2d(w2_, H_PAD, H_PAD).astype(compute_dtype),
            c2=_pad2d(c2_[None, :], 1, H_PAD),                      # f32
            w3=_pad2d(w3, H_PAD, O_PAD).astype(compute_dtype),
            b3=_pad2d(b3[None, :], 1, O_PAD),                       # f32
        )

    return dict(
        bn=pack(w1 * s1[None, :], b1 * s1 + t1, w2 * s2[None, :], b2 * s2 + t2),
        no_bn=pack(w1, b1, w2, b2),
    )


# ----------------------------------------------------------------------------
# Pallas calls.
# ----------------------------------------------------------------------------
def _fused_call(xp, p):
    """Whole-array VMEM refs, no grid: zero pipeline overhead for tiny batches."""
    vmem = pl.BlockSpec(memory_space=pltpu.MemorySpace.VMEM)
    return pl.pallas_call(
        _mlp_kernel,
        out_shape=jax.ShapeDtypeStruct((xp.shape[0], O_PAD), jnp.float32),
        in_specs=[vmem] * 7,
        out_specs=vmem,
    )(xp, p["w1"], p["c1"], p["w2"], p["c2"], p["w3"], p["b3"])


def _tiled_call(xp, p, b_tile):
    """Batch-tiled grid; weights stay VMEM-resident (index_map -> (0, 0))."""
    b_pad = xp.shape[0]
    return pl.pallas_call(
        _mlp_kernel,
        out_shape=jax.ShapeDtypeStruct((b_pad, O_PAD), jnp.float32),
        grid=(b_pad // b_tile,),
        in_specs=[
            pl.BlockSpec((b_tile, F_PAD), lambda i: (i, 0)),
            pl.BlockSpec((F_PAD, H_PAD), lambda i: (0, 0)),
            pl.BlockSpec((1, H_PAD), lambda i: (0, 0)),
            pl.BlockSpec((H_PAD, H_PAD), lambda i: (0, 0)),
            pl.BlockSpec((1, H_PAD), lambda i: (0, 0)),
            pl.BlockSpec((H_PAD, O_PAD), lambda i: (0, 0)),
            pl.BlockSpec((1, O_PAD), lambda i: (0, 0)),
        ],
        out_specs=pl.BlockSpec((b_tile, O_PAD), lambda i: (i, 0)),
        compiler_params=pltpu.CompilerParams(
            dimension_semantics=("parallel",)),
    )(xp, p["w1"], p["c1"], p["w2"], p["c2"], p["w3"], p["b3"])


def missile_model_forward(prepared, x, *, batch_tile=DEFAULT_B_TILE):
    """Pallas-backed eval-mode forward. x: (B, 9) float32 -> (B, 1) float32."""
    B = x.shape[0]
    assert x.shape[1] == INPUT_SIZE
    p = prepared["bn"] if B > 1 else prepared["no_bn"]   # BN guard: skip at B==1
    cdt = p["w1"].dtype

    if B <= FUSED_MAX_B:
        b_pad = max(8, _round_up(B, 8))
        xp = jnp.zeros((b_pad, F_PAD), cdt).at[:B, :INPUT_SIZE].set(x.astype(cdt))
        out = _fused_call(xp, p)
    else:
        b_pad = _round_up(B, batch_tile)
        xp = jnp.zeros((b_pad, F_PAD), cdt).at[:B, :INPUT_SIZE].set(x.astype(cdt))
        out = _tiled_call(xp, p, batch_tile)

    return out[:B, :OUTPUT_SIZE]


# ----------------------------------------------------------------------------
# References.
# ----------------------------------------------------------------------------
def missile_model_reference(params, x):
    """Pure-JAX f32 reference of the eval-mode PyTorch forward."""
    h = x @ params["w1"] + params["b1"]
    if x.shape[0] > 1:
        s1, t1 = _fold_bn(*params["bn1"])
        h = h * s1 + t1
    h = jnp.maximum(h, 0.0)
    h = h @ params["w2"] + params["b2"]
    if x.shape[0] > 1:
        s2, t2 = _fold_bn(*params["bn2"])
        h = h * s2 + t2
    h = jnp.maximum(h, 0.0)
    return h @ params["w3"] + params["b3"]


def matched_reference(prepared, x):
    """Reference using the same prepared bf16 operands as the kernel."""
    p = prepared["bn"] if x.shape[0] > 1 else prepared["no_bn"]
    cdt = p["w1"].dtype
    xp = jnp.zeros((x.shape[0], F_PAD), cdt).at[:, :INPUT_SIZE].set(x.astype(cdt))
    h = jnp.dot(xp, p["w1"], preferred_element_type=jnp.float32) + p["c1"]
    h = jnp.maximum(h, 0.0)
    h = jnp.dot(h.astype(cdt), p["w2"], preferred_element_type=jnp.float32) + p["c2"]
    h = jnp.maximum(h, 0.0)
    o = jnp.dot(h.astype(cdt), p["w3"], preferred_element_type=jnp.float32) + p["b3"]
    return o[:, :OUTPUT_SIZE]


# ----------------------------------------------------------------------------
# Synthetic parameters (PyTorch-Linear-style uniform init).
# ----------------------------------------------------------------------------
def init_params(key):
    ks = jax.random.split(key, 14)

    def linear(kw, kb, fan_in, fan_out):
        bound = 1.0 / (fan_in ** 0.5)
        w = jax.random.uniform(kw, (fan_in, fan_out), jnp.float32, -bound, bound)
        b = jax.random.uniform(kb, (fan_out,), jnp.float32, -bound, bound)
        return w, b

    def bn(kg, kb, km, kv, n):
        gamma = jax.random.uniform(kg, (n,), jnp.float32, 0.5, 1.5)
        beta = 0.1 * jax.random.normal(kb, (n,), jnp.float32)
        mean = 0.1 * jax.random.normal(km, (n,), jnp.float32)
        var = jax.random.uniform(kv, (n,), jnp.float32, 0.5, 1.5)
        return gamma, beta, mean, var

    w1, b1 = linear(ks[0], ks[1], INPUT_SIZE, HIDDEN_SIZE)
    w2, b2 = linear(ks[2], ks[3], HIDDEN_SIZE, HIDDEN_SIZE)
    w3, b3 = linear(ks[4], ks[5], HIDDEN_SIZE, OUTPUT_SIZE)
    bn1 = bn(ks[6], ks[7], ks[8], ks[9], HIDDEN_SIZE)
    bn2 = bn(ks[10], ks[11], ks[12], ks[13], HIDDEN_SIZE)
    return dict(w1=w1, b1=b1, w2=w2, b2=b2, w3=w3, b3=b3, bn1=bn1, bn2=bn2)


if __name__ == "__main__":
    key = jax.random.PRNGKey(0)
    k_params, k_x1, k_x2, k_x3 = jax.random.split(key, 4)

    params = init_params(k_params)
    prepared = jax.tree_util.tree_map(jax.block_until_ready, prepare_params(params))

    fwd = jax.jit(missile_model_forward)

    # 1) Small batch (B=2): fused whole-VMEM path, BN active.
    x2 = jax.random.normal(k_x1, (2, INPUT_SIZE), jnp.float32)
    out2 = jax.block_until_ready(fwd(prepared, x2))
    assert out2.shape == (2, OUTPUT_SIZE)
    assert jnp.allclose(out2, matched_reference(prepared, x2), atol=1e-3, rtol=1e-3)
    assert jnp.allclose(out2, missile_model_reference(params, x2), atol=5e-2, rtol=5e-2)

    # 2) Batch of 1: BN skipped (matches the `x.shape[0] > 1` guard).
    x1 = jax.random.normal(k_x2, (1, INPUT_SIZE), jnp.float32)
    out1 = jax.block_until_ready(fwd(prepared, x1))
    assert out1.shape == (1, OUTPUT_SIZE)
    assert jnp.allclose(out1, matched_reference(prepared, x1), atol=1e-3, rtol=1e-3)
    assert jnp.allclose(out1, missile_model_reference(params, x1), atol=5e-2, rtol=5e-2)

    # 3) Larger batch: batch-tiled grid path (parallel batch axis).
    xL = jax.random.normal(k_x3, (600, INPUT_SIZE), jnp.float32)
    outL = jax.block_until_ready(fwd(prepared, xL))
    assert outL.shape == (600, OUTPUT_SIZE)
    assert jnp.allclose(outL, matched_reference(prepared, xL), atol=1e-3, rtol=1e-3)
    assert jnp.allclose(outL, missile_model_reference(params, xL), atol=5e-2, rtol=5e-2)

    print("KERNEL_OK")
</pallas_src>

<mosaic_0001>
module attributes {stable_mosaic.version = 11 : i64} {
  func.func @_mlp_kernel(%arg0: memref<8x128xbf16, #tpu.memory_space<vmem>>, %arg1: memref<128x128xbf16, #tpu.memory_space<vmem>>, %arg2: memref<1x128xf32, #tpu.memory_space<vmem>>, %arg3: memref<128x128xbf16, #tpu.memory_space<vmem>>, %arg4: memref<1x128xf32, #tpu.memory_space<vmem>>, %arg5: memref<128x128xbf16, #tpu.memory_space<vmem>>, %arg6: memref<1x128xf32, #tpu.memory_space<vmem>>, %arg7: memref<8x128xf32, #tpu.memory_space<vmem>>) attributes {dimension_semantics = [], scalar_prefetch = 0 : i64, scratch_operands = 0 : i64, tpu.core_type = #tpu.core_type<tc>} {
    %c0 = arith.constant 0 : index
    %c0_0 = arith.constant 0 : index
    %0 = vector.load %arg0[%c0, %c0_0] : memref<8x128xbf16, #tpu.memory_space<vmem>>, vector<8x128xbf16>
    %c0_1 = arith.constant 0 : index
    %c0_2 = arith.constant 0 : index
    %1 = vector.load %arg1[%c0_1, %c0_2] : memref<128x128xbf16, #tpu.memory_space<vmem>>, vector<128x128xbf16>
    %cst = arith.constant dense<0.000000e+00> : vector<8x128xf32>
    %2 = tpu.matmul %0, %1, %cst {dimension_numbers = #tpu.dot_dimension_numbers<[1], [0], [0], [1], [0, 0, 1, 1], [], []>} : vector<8x128xbf16>, vector<128x128xbf16>, vector<8x128xf32> -> vector<8x128xf32>
    %c0_3 = arith.constant 0 : index
    %c0_4 = arith.constant 0 : index
    %3 = vector.load %arg2[%c0_3, %c0_4] : memref<1x128xf32, #tpu.memory_space<vmem>>, vector<1x128xf32>
    %4 = vector.broadcast %3 : vector<1x128xf32> to vector<8x128xf32>
    %5 = arith.addf %2, %4 : vector<8x128xf32>
    %cst_5 = arith.constant 0.000000e+00 : f32
    %6 = vector.broadcast %cst_5 : f32 to vector<8x128xf32>
    %7 = arith.maximumf %5, %6 : vector<8x128xf32>
    %8 = arith.truncf %7 : vector<8x128xf32> to vector<8x128xbf16>
    %c0_6 = arith.constant 0 : index
    %c0_7 = arith.constant 0 : index
    %9 = vector.load %arg3[%c0_6, %c0_7] : memref<128x128xbf16, #tpu.memory_space<vmem>>, vector<128x128xbf16>
    %cst_8 = arith.constant dense<0.000000e+00> : vector<8x128xf32>
    %10 = tpu.matmul %8, %9, %cst_8 {dimension_numbers = #tpu.dot_dimension_numbers<[1], [0], [0], [1], [0, 0, 1, 1], [], []>} : vector<8x128xbf16>, vector<128x128xbf16>, vector<8x128xf32> -> vector<8x128xf32>
    %c0_9 = arith.constant 0 : index
    %c0_10 = arith.constant 0 : index
    %11 = vector.load %arg4[%c0_9, %c0_10] : memref<1x128xf32, #tpu.memory_space<vmem>>, vector<1x128xf32>
    %12 = vector.broadcast %11 : vector<1x128xf32> to vector<8x128xf32>
    %13 = arith.addf %10, %12 : vector<8x128xf32>
    %cst_11 = arith.constant 0.000000e+00 : f32
    %14 = vector.broadcast %cst_11 : f32 to vector<8x128xf32>
    %15 = arith.maximumf %13, %14 : vector<8x128xf32>
    %16 = arith.truncf %15 : vector<8x128xf32> to vector<8x128xbf16>
    %c0_12 = arith.constant 0 : index
    %c0_13 = arith.constant 0 : index
    %17 = vector.load %arg5[%c0_12, %c0_13] : memref<128x128xbf16, #tpu.memory_space<vmem>>, vector<128x128xbf16>
    %cst_14 = arith.constant dense<0.000000e+00> : vector<8x128xf32>
    %18 = tpu.matmul %16, %17, %cst_14 {dimension_numbers = #tpu.dot_dimension_numbers<[1], [0], [0], [1], [0, 0, 1, 1], [], []>} : vector<8x128xbf16>, vector<128x128xbf16>, vector<8x128xf32> -> vector<8x128xf32>
    %c0_15 = arith.constant 0 : index
    %c0_16 = arith.constant 0 : index
    %19 = vector.load %arg6[%c0_15, %c0_16] : memref<1x128xf32, #tpu.memory_space<vmem>>, vector<1x128xf32>
    %20 = vector.broadcast %19 : vector<1x128xf32> to vector<8x128xf32>
    %21 = arith.addf %18, %20 : vector<8x128xf32>
    %c0_17 = arith.constant 0 : index
    %c0_18 = arith.constant 0 : index
    %22 = vector.load %arg7[%c0_17, %c0_18] : memref<8x128xf32, #tpu.memory_space<vmem>>, vector<8x128xf32>
    tpu.vector_store %arg7[%c0_17, %c0_18], %21 {strides = array<i32>} : memref<8x128xf32, #tpu.memory_space<vmem>>, vector<8x128xf32>,
    return
  }
}

</mosaic_0001>

<llo_original>
// kernel: missile_model_forward.1
$region0: #{missile_model_forward.1}
  #allocation0 [shape = 'u32[]', space=smem, size = 0x4, offset = 0x4, fixed_abs, tag = 'smem constant byte address 0x4 - core index']
  #allocation1 [shape = 'u32[72,128]{1,0:T(1,128)}', space=vmem, size = 0x9000, scoped, tag = 'internal scratch']
  %s0 = inlined_call_operand.vmem [shape: bf16[8,128], index: 0, kind: input, shape index: {}]
  %s1 = inlined_call_operand.hbm [shape: bf16[128,128], index: 1, kind: input, shape index: {}]
  %s2 = inlined_call_operand.vmem [shape: f32[1,128], index: 2, kind: input, shape index: {}]
  %s3 = inlined_call_operand.hbm [shape: bf16[128,128], index: 3, kind: input, shape index: {}]
  %s4 = inlined_call_operand.vmem [shape: f32[1,128], index: 4, kind: input, shape index: {}]
  %s5 = inlined_call_operand.hbm [shape: bf16[128,128], index: 5, kind: input, shape index: {}]
  %s6 = inlined_call_operand.vmem [shape: f32[1,128], index: 6, kind: input, shape index: {}]
  %s7 = inlined_call_operand.vmem [shape: f32[8,128], index: 7, kind: output, shape index: {}]
  %s8 = sld [smem:[#allocation0]]
  $region50: #{missile_model_forward.1} parent=0
    _
  %s10 = ssub.s32 1, %s8
  %s11 = scalar_select 0, %s10, %s8
  $region1: #{missile_model_forward.1} parent=0
    #allocation2 [shape = 'u8[32768]{0}', space=vmem, size = 0x8000, scoped, tag = 'input window, operand 1, single buffered']
    #allocation3 [shape = 's32[1]{0}', space=sflag, size = 0x4, scoped, tag = 'scoped memory for missile_model_forward.1']
    #allocation4 [shape = 'u8[32768]{0}', space=vmem, size = 0x8000, scoped, tag = 'input window, operand 3, single buffered']
    #allocation5 [shape = 's32[1]{0}', space=sflag, size = 0x4, scoped, tag = 'scoped memory for missile_model_forward.1']
    #allocation6 [shape = 'u8[32768]{0}', space=vmem, size = 0x8000, scoped, tag = 'input window, operand 5, single buffered']
    %12 = vsyncpa [#allocation3], 0
    %13 = vsyncpa [#allocation5], 0
    // Predicated region
    $region2: #{missile_model_forward.1} parent=1 // pred_check
      _
    $region3: #{missile_model_forward.1} parent=1 // pred_check_branch
      %15 = sbr.rel (0) target = $region5
    $region4: #{missile_model_forward.1} parent=1 // pred_region
      _
    $region5: #{missile_model_forward.1} parent=1 // pred_fallthru
      _
    // Predicated region
    $region6: #{missile_model_forward.1} parent=1 // pred_check
      _
    $region7: #{missile_model_forward.1} parent=1 // pred_check_branch
      %17 = sbr.rel (0) target = $region9
    $region8: #{missile_model_forward.1} parent=1 // pred_region
      %19 = vsyncadd [#allocation3], 0
      %s20 = sshll.u32 %s1, 4
      %s21 = int_to_ptr.hbm [resolvable:$true] %s20
      %s22 = sshll.u32 [#allocation2], 4
      %s23 = int_to_ptr.vmem [resolvable:$true] %s22
      %28 = dma.hbm_to_vmem [thread:$0]  %s21, 1024, %s23, [#allocation3], 64, 64, 4
    $region9: #{missile_model_forward.1} parent=1 // pred_fallthru
      _
    // Predicated region
    $region10: #{missile_model_forward.1} parent=1 // pred_check
      _
    $region11: #{missile_model_forward.1} parent=1 // pred_check_branch
      %30 = sbr.rel (0) target = $region13
    $region12: #{missile_model_forward.1} parent=1 // pred_region
      _
    $region13: #{missile_model_forward.1} parent=1 // pred_fallthru
      _
    // Predicated region
    $region14: #{missile_model_forward.1} parent=1 // pred_check
      _
    $region15: #{missile_model_forward.1} parent=1 // pred_check_branch
      %32 = sbr.rel (0) target = $region17
    $region16: #{missile_model_forward.1} parent=1 // pred_region
      %34 = vsyncadd [#allocation5], 0
      %s35 = sshll.u32 %s3, 4
      %s36 = int_to_ptr.hbm [resolvable:$true] %s35
      %s37 = sshll.u32 [#allocation4], 4
      %s38 = int_to_ptr.vmem [resolvable:$true] %s37
      %43 = dma.hbm_to_vmem [thread:$0]  %s36, 1024, %s38, [#allocation5], 64, 64, 4
    $region17: #{missile_model_forward.1} parent=1 // pred_fallthru
      _
    // Predicated region
    $region18: #{missile_model_forward.1} parent=1 // pred_check
      _
    $region19: #{missile_model_forward.1} parent=1 // pred_check_branch
      %45 = sbr.rel (0) target = $region21
    $region20: #{missile_model_forward.1} parent=1 // pred_region
      _
    $region21: #{missile_model_forward.1} parent=1 // pred_fallthru
      _
    // Predicated region
    $region22: #{missile_model_forward.1} parent=1 // pred_check
      _
    $region23: #{missile_model_forward.1} parent=1 // pred_check_branch
      %47 = sbr.rel (0) target = $region25
    $region24: #{missile_model_forward.1} parent=1 // pred_region
      %49 = vsyncadd [#allocation5], 0
      %s50 = sshll.u32 %s5, 4
      %s51 = int_to_ptr.hbm [resolvable:$true] %s50
      %s52 = sshll.u32 [#allocation6], 4
      %s53 = int_to_ptr.vmem [resolvable:$true] %s52
      %58 = dma.hbm_to_vmem [thread:$0]  %s51, 1024, %s53, [#allocation5], 64, 64, 4
    $region25: #{missile_model_forward.1} parent=1 // pred_fallthru
      _
    // Predicated region
    $region26: #{missile_model_forward.1} parent=1 // pred_check
      _
    $region27: #{missile_model_forward.1} parent=1 // pred_check_branch
      %60 = sbr.rel (0) target = $region29
    $region28: #{missile_model_forward.1} parent=1 // pred_region
      _
    $region29: #{missile_model_forward.1} parent=1 // pred_fallthru
      _
    // Predicated region
    $region30: #{missile_model_forward.1} parent=1 // pred_check
      _
    $region31: #{missile_model_forward.1} parent=1 // pred_check_branch
      %62 = sbr.rel (0) target = $region33
    $region32: #{missile_model_forward.1} parent=1 // pred_region
      %64 = dma.done [#allocation3], 1024
    $region33: #{missile_model_forward.1} parent=1 // pred_fallthru
      _
    // Predicated region
    $region34: #{missile_model_forward.1} parent=1 // pred_check
      _
    $region35: #{missile_model_forward.1} parent=1 // pred_check_branch
      %66 = sbr.rel (0) target = $region37
    $region36: #{missile_model_forward.1} parent=1 // pred_region
      %68 = dma.done [#allocation5], 1024
    $region37: #{missile_model_forward.1} parent=1 // pred_fallthru
      _
    // Predicated region
    $region38: #{missile_model_forward.1} parent=1 // pred_check
      _
    $region39: #{missile_model_forward.1} parent=1 // pred_check_branch
      %70 = sbr.rel (0) target = $region41
    $region40: #{missile_model_forward.1} parent=1 // pred_region
      %72 = dma.done [#allocation5], 1024
    $region41: #{missile_model_forward.1} parent=1 // pred_fallthru
      _
    %v73 = vld [vmem:[%s0] sm:$0xf]
    %v74 = vld [vmem:[#allocation2] sm:$0xf]
    %v75 = vld [vmem:[#allocation2 + $0x4] sm:$0xf]
    %v76 = vld [vmem:[#allocation2 + $0x8] sm:$0xf]
    %v77 = vld [vmem:[#allocation2 + $0xc] sm:$0xf]
    %v78 = vld [vmem:[#allocation2 + $0x10] sm:$0xf]
    %v79 = vld [vmem:[#allocation2 + $0x14] sm:$0xf]
    %v80 = vld [vmem:[#allocation2 + $0x18] sm:$0xf]
    %v81 = vld [vmem:[#allocation2 + $0x1c] sm:$0xf]
    %v82 = vld [vmem:[#allocation2 + $0x20] sm:$0xf]
    %v83 = vld [vmem:[#allocation2 + $0x24] sm:$0xf]
    %v84 = vld [vmem:[#allocation2 + $0x28] sm:$0xf]
    %v85 = vld [vmem:[#allocation2 + $0x2c] sm:$0xf]
    %v86 = vld [vmem:[#allocation2 + $0x30] sm:$0xf]
    %v87 = vld [vmem:[#allocation2 + $0x34] sm:$0xf]
    %v88 = vld [vmem:[#allocation2 + $0x38] sm:$0xf]
    %v89 = vld [vmem:[#allocation2 + $0x3c] sm:$0xf]
    %v90 = vld [vmem:[%s2] sm:$0x1]
    %v92 = vperm.slane %v90, 0
    %v110 = vunpack.c.l.b16 %v74
    %v111 = vunpack.c.l.b16 %v75
    %v112 = vunpack.c.l.b16 %v76
    %v113 = vunpack.c.l.b16 %v77
    %v114 = vunpack.c.l.b16 %v78
    %v115 = vunpack.c.l.b16 %v79
    %v116 = vunpack.c.l.b16 %v80
    %v117 = vunpack.c.l.b16 %v81
    %v118 = vunpack.c.l.b16 %v82
    %v119 = vunpack.c.l.b16 %v83
    %v120 = vunpack.c.l.b16 %v84
    %v121 = vunpack.c.l.b16 %v85
    %v122 = vunpack.c.l.b16 %v86
    %v123 = vunpack.c.l.b16 %v87
    %v124 = vunpack.c.l.b16 %v88
    %v125 = vunpack.c.l.b16 %v89
    %v126 = vpack.c.b16 %v111, %v110
    %v127 = vpack.c.b16 %v113, %v112
    %v128 = vpack.c.b16 %v115, %v114
    %v129 = vpack.c.b16 %v117, %v116
    %v130 = vpack.c.b16 %v119, %v118
    %v131 = vpack.c.b16 %v121, %v120
    %v132 = vpack.c.b16 %v123, %v122
    %v133 = vpack.c.b16 %v125, %v124
    %142 = vmatpush.bf16.msra.mxu0 %v133
    %143 = vmatpush.bf16.msra.mxu0 %v132
    %144 = vmatpush.bf16.msra.mxu0 %v131
    %145 = vmatpush.bf16.msra.mxu0 %v130
    %146 = vmatpush.bf16.msra.mxu0 %v129
    %147 = vmatpush.bf16.msra.mxu0 %v128
    %148 = vmatpush.bf16.msra.mxu0 %v127
    %149 = vmatpush.bf16.msra.mxu0 %v126
    %150 = vmatmul.bf16.gmra.mxu0 %v73
    %v151 = vpop.f32.mrf.mxu0
    %v152 = vadd.f32 %v92, %v151
    %v153 = vpop.f32.mrf.mxu0
    %154 = vdwg.mxu0
    %v155 = vmax.f32 %v152, 0.0
    %v156 = vpack.c.bf16 %v155, %v155
    %v157 = vld [vmem:[#allocation4] sm:$0xf]
    %v158 = vld [vmem:[#allocation4 + $0x4] sm:$0xf]
    %v159 = vld [vmem:[#allocation4 + $0x8] sm:$0xf]
    %v160 = vld [vmem:[#allocation4 + $0xc] sm:$0xf]
    %v161 = vld [vmem:[#allocation4 + $0x10] sm:$0xf]
    %v162 = vld [vmem:[#allocation4 + $0x14] sm:$0xf]
    %v163 = vld [vmem:[#allocation4 + $0x18] sm:$0xf]
    %v164 = vld [vmem:[#allocation4 + $0x1c] sm:$0xf]
    %v165 = vld [vmem:[#allocation4 + $0x20] sm:$0xf]
    %v166 = vld [vmem:[#allocation4 + $0x24] sm:$0xf]
    %v167 = vld [vmem:[#allocation4 + $0x28] sm:$0xf]
    %v168 = vld [vmem:[#allocation4 + $0x2c] sm:$0xf]
    %v169 = vld [vmem:[#allocation4 + $0x30] sm:$0xf]
    %v170 = vld [vmem:[#allocation4 + $0x34] sm:$0xf]
    %v171 = vld [vmem:[#allocation4 + $0x38] sm:$0xf]
    %v172 = vld [vmem:[#allocation4 + $0x3c] sm:$0xf]
    %v173 = vld [vmem:[%s4] sm:$0x1]
    %v175 = vperm.slane %v173, 0
    %v193 = vunpack.c.l.b16 %v157
    %v194 = vunpack.c.l.b16 %v158
    %v195 = vunpack.c.l.b16 %v159
    %v196 = vunpack.c.l.b16 %v160
    %v197 = vunpack.c.l.b16 %v161
    %v198 = vunpack.c.l.b16 %v162
    %v199 = vunpack.c.l.b16 %v163
    %v200 = vunpack.c.l.b16 %v164
    %v201 = vunpack.c.l.b16 %v165
    %v202 = vunpack.c.l.b16 %v166
    %v203 = vunpack.c.l.b16 %v167
    %v204 = vunpack.c.l.b16 %v168
    %v205 = vunpack.c.l.b16 %v169
    %v206 = vunpack.c.l.b16 %v170
    %v207 = vunpack.c.l.b16 %v171
    %v208 = vunpack.c.l.b16 %v172
    %v209 = vpack.c.b16 %v194, %v193
    %v210 = vpack.c.b16 %v196, %v195
    %v211 = vpack.c.b16 %v198, %v197
    %v212 = vpack.c.b16 %v200, %v199
    %v213 = vpack.c.b16 %v202, %v201
    %v214 = vpack.c.b16 %v204, %v203
    %v215 = vpack.c.b16 %v206, %v205
    %v216 = vpack.c.b16 %v208, %v207
    %225 = vmatpush.bf16.msra.mxu0 %v216
    %226 = vmatpush.bf16.msra.mxu0 %v215
    %227 = vmatpush.bf16.msra.mxu0 %v214
    %228 = vmatpush.bf16.msra.mxu0 %v213
    %229 = vmatpush.bf16.msra.mxu0 %v212
    %230 = vmatpush.bf16.msra.mxu0 %v211
    %231 = vmatpush.bf16.msra.mxu0 %v210
    %232 = vmatpush.bf16.msra.mxu0 %v209
    %233 = vmatmul.bf16.gmra.mxu0 %v156
    %v234 = vpop.f32.mrf.mxu0
    %v235 = vadd.f32 %v175, %v234
    %v236 = vpop.f32.mrf.mxu0
    %237 = vdwg.mxu0
    %v238 = vmax.f32 %v235, 0.0
    %v239 = vpack.c.bf16 %v238, %v238
    %v240 = vld [vmem:[#allocation6] sm:$0xf]
    %v241 = vld [vmem:[#allocation6 + $0x4] sm:$0xf]
    %v242 = vld [vmem:[#allocation6 + $0x8] sm:$0xf]
    %v243 = vld [vmem:[#allocation6 + $0xc] sm:$0xf]
    %v244 = vld [vmem:[#allocation6 + $0x10] sm:$0xf]
    %v245 = vld [vmem:[#allocation6 + $0x14] sm:$0xf]
    %v246 = vld [vmem:[#allocation6 + $0x18] sm:$0xf]
    %v247 = vld [vmem:[#allocation6 + $0x1c] sm:$0xf]
    %v248 = vld [vmem:[#allocation6 + $0x20] sm:$0xf]
    %v249 = vld [vmem:[#allocation6 + $0x24] sm:$0xf]
    %v250 = vld [vmem:[#allocation6 + $0x28] sm:$0xf]
    %v251 = vld [vmem:[#allocation6 + $0x2c] sm:$0xf]
    %v252 = vld [vmem:[#allocation6 + $0x30] sm:$0xf]
    %v253 = vld [vmem:[#allocation6 + $0x34] sm:$0xf]
    %v254 = vld [vmem:[#allocation6 + $0x38] sm:$0xf]
    %v255 = vld [vmem:[#allocation6 + $0x3c] sm:$0xf]
    %v256 = vld [vmem:[%s6] sm:$0x1]
    %v258 = vperm.slane %v256, 0
    %v276 = vunpack.c.l.b16 %v240
    %v277 = vunpack.c.l.b16 %v241
    %v278 = vunpack.c.l.b16 %v242
    %v279 = vunpack.c.l.b16 %v243
    %v280 = vunpack.c.l.b16 %v244
    %v281 = vunpack.c.l.b16 %v245
    %v282 = vunpack.c.l.b16 %v246
    %v283 = vunpack.c.l.b16 %v247
    %v284 = vunpack.c.l.b16 %v248
    %v285 = vunpack.c.l.b16 %v249
    %v286 = vunpack.c.l.b16 %v250
    %v287 = vunpack.c.l.b16 %v251
    %v288 = vunpack.c.l.b16 %v252
    %v289 = vunpack.c.l.b16 %v253
    %v290 = vunpack.c.l.b16 %v254
    %v291 = vunpack.c.l.b16 %v255
    %v292 = vpack.c.b16 %v277, %v276
    %v293 = vpack.c.b16 %v279, %v278
    %v294 = vpack.c.b16 %v281, %v280
    %v295 = vpack.c.b16 %v283, %v282
    %v296 = vpack.c.b16 %v285, %v284
    %v297 = vpack.c.b16 %v287, %v286
    %v298 = vpack.c.b16 %v289, %v288
    %v299 = vpack.c.b16 %v291, %v290
    %308 = vmatpush.bf16.msra.mxu0 %v299
    %309 = vmatpush.bf16.msra.mxu0 %v298
    %310 = vmatpush.bf16.msra.mxu0 %v297
    %311 = vmatpush.bf16.msra.mxu0 %v296
    %312 = vmatpush.bf16.msra.mxu0 %v295
    %313 = vmatpush.bf16.msra.mxu0 %v294
    %314 = vmatpush.bf16.msra.mxu0 %v293
    %315 = vmatpush.bf16.msra.mxu0 %v292
    %316 = vmatmul.bf16.gmra.mxu0 %v239
    %v317 = vpop.f32.mrf.mxu0
    %v318 = vadd.f32 %v258, %v317
    %v319 = vpop.f32.mrf.mxu0
    %320 = vdwg.mxu0
    %321 = vst [vmem:[%s7] sm:$0xff] %v318
    // Predicated region
    $region42: #{missile_model_forward.1} parent=1 // pred_check
      _
    $region43: #{missile_model_forward.1} parent=1 // pred_check_branch
      %323 = sbr.rel (0) target = $region45
    $region44: #{missile_model_forward.1} parent=1 // pred_region
      _
    $region45: #{missile_model_forward.1} parent=1 // pred_fallthru
      _
    // Predicated region
    $region46: #{missile_model_forward.1} parent=1 // pred_check
      _
    $region47: #{missile_model_forward.1} parent=1 // pred_check_branch
      %325 = sbr.rel (0) target = $region49
    $region48: #{missile_model_forward.1} parent=1 // pred_region
      _
    $region49: #{missile_model_forward.1} parent=1 // pred_fallthru
      _
    %326 = vsyncpa [#allocation3], 1
    %327 = vsyncpa [#allocation5], 1

</llo_original>
